<compile_context>
chip_gen: v5e
topology: v5e:2x2
jax: 0.10.0
libtpu: 0.0.40
codegen_flags: <defaults>
</compile_context>

<pallas_src>
import functools

import jax
import jax.numpy as jnp
from jax.experimental import pallas as pl
from jax.experimental.pallas import tpu as pltpu


IGNORE_INDEX = 255
THRESH = 0.6
MIN_KEPT = 350000  # module default; with small inputs the k-th statistic
                   # clamps to (num_valid - 1), exactly as in the PyTorch code.

# Conservative live-VMEM budget used only to size the pixel tile
# (inputs/outputs double-buffered + in-kernel (C, TP) temporaries).
_TILE_VMEM_BUDGET = 24 << 20


def _round_up(x, m):
    return ((x + m - 1) // m) * m


def _bytes_per_pixel(C):
    # 2x f32 score block + 2x bf16 err block (double buffered) + ~6 (C, TP)
    # f32 temporaries, plus a few (1, TP) rows.  Intentionally conservative.
    return 40 * C + 64


def _choose_tiling(hw, C, B):
    """Returns (hw_pad, tile_p) with tile_p % 128 == 0 and tile_p | hw_pad."""
    bpp = _bytes_per_pixel(C)
    tp_max = min(8192, max(128, ((_TILE_VMEM_BUDGET // bpp) // 128) * 128))
    if B == 1:
        # v7x megacore: try to give the sharded grid >= 2 steps.
        half = ((_round_up(hw, 128) // 2) // 128) * 128
        if half >= 128:
            tp_max = min(tp_max, half)

    if hw % 128 == 0:
        # No pad copy needed: largest 128-multiple divisor of hw that fits.
        k = hw // 128
        for d in range(min(k, tp_max // 128), 0, -1):
            if k % d == 0:
                return hw, 128 * d
        return hw, 128

    # Ragged spatial size: a pad copy is unavoidable, so pad straight to a
    # multiple of the largest tile that fits to keep the grid short.
    tile_p = min(tp_max, _round_up(hw, 128))
    return _round_up(hw, tile_p), tile_p


def _pixel_kernel(score_ref, tgt_ref, ce_ref, err_ref, *, ignore_index):
    """Per-pixel elementwise hot path.

    score_ref : (1, C, TP) f32 logits  (classes on sublanes, pixels on lanes)
    tgt_ref   : (1, 1, TP) i32 labels  (ignore_index marks void pixels)
    outputs:
      ce_ref  (1, TP) f32  : cross entropy, 0 on ignored/padded pixels
      err_ref (C, TP) bf16 : |onehot(label) - softmax(softmax(logits))|,
                             -1.0 on ignored/padded pixels
    """
    x = score_ref[0]                                  # (C, TP) f32
    t = tgt_ref[0]                                    # (1, TP) i32
    C, TP = x.shape

    valid = t != ignore_index                         # (1, TP) bool
    t_clamped = jnp.where(valid, t, 0)

    # First softmax over the class (sublane) axis.  The division is replaced
    # by an approx reciprocal on the (1, TP) row (EUP slot) + broadcast mul.
    m = jnp.max(x, axis=0, keepdims=True)
    ex = jnp.exp(x - m)
    denom = jnp.sum(ex, axis=0, keepdims=True)        # (1, TP)
    probs = ex * pl.reciprocal(denom, approx=True)    # (C, TP)

    # Second softmax (LovaszSoftmax re-applies softmax to the probabilities);
    # probs in [0, 1] so no max-subtraction is needed for stability.
    ex2 = jnp.exp(probs)
    probs2 = ex2 * pl.reciprocal(jnp.sum(ex2, axis=0, keepdims=True),
                                 approx=True)

    # One-hot of the clamped label via sublane iota.  On valid pixels this is
    # also the Lovasz foreground mask (ignore_index >= C never matches).
    class_ids = jax.lax.broadcasted_iota(jnp.int32, (C, TP), 0)
    onehot = (class_ids == t_clamped).astype(jnp.float32)

    # Cross entropy: lse - x_t, forced to 0 on ignored pixels.
    x_t = jnp.sum(x * onehot, axis=0, keepdims=True)
    lse = jnp.log(denom) + m
    ce_ref[...] = jnp.where(valid, lse - x_t, 0.0)

    # Lovasz errors; invalid/padded pixels pushed to -1 so a descending sort
    # sends them to the tail (clamped back to 0 after the sort).  Stored in
    # bf16 to halve writeback and downstream sort traffic.
    err_ref[...] = jnp.where(valid, jnp.abs(onehot - probs2),
                             -1.0).astype(err_ref.dtype)


def _run_pixel_kernel(score3, target3, tile_p, ignore_index):
    """score3: (B, C, HWp) f32, target3: (B, 1, HWp) i32, HWp % tile_p == 0."""
    B, C, hw_pad = score3.shape
    n_tiles = hw_pad // tile_p
    p_total = B * hw_pad

    # Outputs are written directly in class-major, flat-pixel order
    # (column = b * hw_pad + pixel), so no transpose is needed afterwards.
    flat_map = lambda b, i: (0, b * n_tiles + i)

    # VMEM limit derived from the tile-size estimate: >= the 32 MiB scoped
    # default on v6e/v7x, above the 16 MiB default on v5e, and below v7x's
    # 64 MiB physical VMEM.
    est = tile_p * _bytes_per_pixel(C)
    vmem_limit = int(min(max(2 * est, 32 << 20), 48 << 20))

    return pl.pallas_call(
        functools.partial(_pixel_kernel, ignore_index=ignore_index),
        out_shape=(
            jax.ShapeDtypeStruct((1, p_total), jnp.float32),   # CE
            jax.ShapeDtypeStruct((C, p_total), jnp.bfloat16),  # Lovasz errors
        ),
        grid_spec=pltpu.PrefetchScalarGridSpec(
            num_scalar_prefetch=0,
            grid=(B, n_tiles),
            in_specs=[
                pl.BlockSpec((1, C, tile_p), lambda b, i: (b, 0, i)),
                pl.BlockSpec((1, 1, tile_p), lambda b, i: (b, 0, i)),
            ],
            out_specs=[
                pl.BlockSpec((1, tile_p), flat_map),
                pl.BlockSpec((C, tile_p), flat_map),
            ],
        ),
        compiler_params=pltpu.CompilerParams(
            dimension_semantics=("parallel", "parallel"),
            vmem_limit_bytes=vmem_limit),
    )(score3, target3)


@functools.partial(jax.jit, static_argnames=("ignore_index", "thresh", "min_kept"))
def ohem_cross_entropy_2d(score, target,
                          ignore_index=IGNORE_INDEX,
                          thresh=THRESH,
                          min_kept=MIN_KEPT):
    """Forward pass of OhemCrossEntropy_2D.

    score:  [B, C, H, W] float logits (NCHW, PyTorch convention)
    target: [B, H, W]    int labels in [0, C) or == ignore_index
    returns scalar loss.
    """
    B, C, H, W = score.shape
    if ignore_index < C:
        raise ValueError("ignore_index must be >= number of classes")
    # TODO(synk): bilinear upsample path (ph != h or pw != w) omitted; the
    # synthetic inputs in this script always have matching spatial sizes.

    hw = H * W
    hw_pad, tile_p = _choose_tiling(hw, C, B)

    score3 = score.reshape(B, C, hw).astype(jnp.float32)   # NCHW view, no transpose
    target3 = target.reshape(B, 1, hw).astype(jnp.int32)
    if hw_pad != hw:
        score3 = jnp.pad(score3, ((0, 0), (0, 0), (0, hw_pad - hw)))
        target3 = jnp.pad(target3, ((0, 0), (0, 0), (0, hw_pad - hw)),
                          constant_values=ignore_index)

    ce_out, errors = _run_pixel_kernel(score3, target3, tile_p, ignore_index)
    p_total = B * hw_pad

    ce = ce_out[0]                          # (Pt,) f32
    labels_flat = target3.reshape(-1)       # same flat (b, pixel) order as outputs
    valid_b = labels_flat != ignore_index   # (Pt,) bool
    # Target-class probability of the first softmax: exp(-ce) on valid pixels.
    gprob = jnp.exp(-ce)

    # ---------------- Lovasz-Softmax (classes='present', per_image=False) ----
    # TODO(synk): per-class descending sort + cumsum (lovasz_grad) has no
    # Pallas sort primitive; done once as a batched lax.sort over all classes.
    fg = (labels_flat[None, :] ==
          jnp.arange(C, dtype=jnp.int32)[:, None]).astype(jnp.bfloat16)  # (C, Pt)
    neg_err_sorted, fg_sorted = jax.lax.sort((-errors, fg), dimension=1, num_keys=1)
    err_sorted = jnp.maximum(-neg_err_sorted.astype(jnp.float32), 0.0)
    fg_sorted = fg_sorted.astype(jnp.float32)
    gts = jnp.sum(fg_sorted, axis=1, keepdims=True)      # (C, 1); fg==0 on invalid
    intersection = gts - jnp.cumsum(fg_sorted, axis=1)
    union = gts + jnp.cumsum(1.0 - fg_sorted, axis=1)
    jac = 1.0 - intersection / union
    jac = jnp.concatenate([jac[:, :1], jac[:, 1:] - jac[:, :-1]], axis=1)
    loss_per_class = jnp.sum(err_sorted * jac, axis=1)   # (C,)
    present = gts[:, 0] > 0
    n_present = jnp.sum(present.astype(jnp.float32))
    lovasz = jnp.where(
        n_present > 0,
        jnp.sum(jnp.where(present, loss_per_class, 0.0)) / jnp.maximum(n_present, 1.0),
        0.0)

    # ---------------- OHEM selection -----------------------------------------
    # k-th smallest valid target prob via a static-size top_k (no full sort).
    probs_for_sel = jnp.where(valid_b, gprob, jnp.inf)
    k_static = min(int(min_kept) + 1, p_total)
    neg_topk, _ = jax.lax.top_k(-probs_for_sel, k_static)
    smallest_sorted = -neg_topk                          # ascending k_static smallest
    n_valid = jnp.sum(valid_b.astype(jnp.int32))
    k_idx = jnp.clip(jnp.minimum(jnp.int32(min_kept), n_valid - 1), 0, k_static - 1)
    min_value = smallest_sorted[k_idx]
    threshold = jnp.maximum(min_value, jnp.float32(thresh))

    keep = (valid_b & (gprob < threshold)).astype(jnp.float32)
    n_kept = jnp.sum(keep)
    mean_kept_ce = jnp.sum(ce * keep) / jnp.maximum(n_kept, 1.0)
    # Guard: the PyTorch reference NaNs/crashes when nothing is kept (e.g. all
    # labels == ignore_index); return 0.0 instead of propagating NaN.
    return jnp.where(n_kept > 0, mean_kept_ce + lovasz, 0.0)


if __name__ == "__main__":
    key = jax.random.PRNGKey(0)
    k1, k2, k3 = jax.random.split(key, 3)

    B, C, H, W = 2, 4, 16, 16
    score = jax.random.normal(k1, (B, C, H, W), dtype=jnp.float32)
    target = jax.random.randint(k2, (B, H, W), 0, C).astype(jnp.int32)
    # sprinkle some ignore_index pixels
    ign = jax.random.bernoulli(k3, 0.1, (B, H, W))
    target = jnp.where(ign, IGNORE_INDEX, target)

    loss = ohem_cross_entropy_2d(score, target)
    jax.block_until_ready(loss)
    print("KERNEL_OK")
</pallas_src>

<mosaic_0001>
module attributes {stable_mosaic.version = 11 : i64} {
  func.func @_pixel_kernel(%arg0: i32, %arg1: i32, %arg2: memref<1x4x256xf32, #tpu.memory_space<vmem>>, %arg3: memref<1x1x256xi32, #tpu.memory_space<vmem>>, %arg4: memref<1x256xf32, #tpu.memory_space<vmem>>, %arg5: memref<4x256xbf16, #tpu.memory_space<vmem>>) attributes {dimension_semantics = [#tpu.dimension_semantics<parallel>, #tpu.dimension_semantics<parallel>], iteration_bounds = array<i64: 2, 1>, scalar_prefetch = 0 : i64, scratch_operands = 0 : i64, tpu.core_type = #tpu.core_type<tc>, window_params = [{transform_indices = @transform_0, window_bounds = array<i64: 1, 4, 256>}, {transform_indices = @transform_1, window_bounds = array<i64: 1, 1, 256>}, {transform_indices = @transform_2, window_bounds = array<i64: 1, 256>}, {transform_indices = @transform_3, window_bounds = array<i64: 4, 256>}]} {
    %c0 = arith.constant 0 : index
    %c0_0 = arith.constant 0 : index
    %c0_1 = arith.constant 0 : index
    %0 = vector.load %arg2[%c0, %c0_0, %c0_1] : memref<1x4x256xf32, #tpu.memory_space<vmem>>, vector<1x4x256xf32>
    %1 = vector.shape_cast %0 : vector<1x4x256xf32> to vector<4x256xf32>
    %c0_2 = arith.constant 0 : index
    %c0_3 = arith.constant 0 : index
    %c0_4 = arith.constant 0 : index
    %2 = vector.load %arg3[%c0_2, %c0_3, %c0_4] : memref<1x1x256xi32, #tpu.memory_space<vmem>>, vector<1x1x256xi32>
    %3 = vector.shape_cast %2 : vector<1x1x256xi32> to vector<1x256xi32>
    %c255_i32 = arith.constant 255 : i32
    %4 = vector.broadcast %c255_i32 : i32 to vector<1x256xi32>
    %5 = arith.cmpi ne, %3, %4 : vector<1x256xi32>
    %c0_i32 = arith.constant 0 : i32
    %6 = vector.broadcast %c0_i32 : i32 to vector<1x256xi32>
    %7 = arith.select %5, %3, %6 : vector<1x256xi1>, vector<1x256xi32>
    %cst = arith.constant dense<0xFF800000> : vector<256xf32>
    %8 = vector.multi_reduction <maximumf>, %1, %cst [0] : vector<4x256xf32> to vector<256xf32>
    %9 = vector.shape_cast %8 : vector<256xf32> to vector<1x256xf32>
    %10 = vector.broadcast %9 : vector<1x256xf32> to vector<4x256xf32>
    %11 = arith.subf %1, %10 : vector<4x256xf32>
    %12 = math.exp %11 : vector<4x256xf32>
    %cst_5 = arith.constant dense<0.000000e+00> : vector<256xf32>
    %13 = vector.multi_reduction <add>, %12, %cst_5 [0] : vector<4x256xf32> to vector<256xf32>
    %14 = vector.shape_cast %13 : vector<256xf32> to vector<1x256xf32>
    %15 = tpu.reciprocal %14 {approx = true} : vector<1x256xf32> -> vector<1x256xf32>
    %16 = vector.broadcast %15 : vector<1x256xf32> to vector<4x256xf32>
    %17 = arith.mulf %12, %16 : vector<4x256xf32>
    %18 = math.exp %17 : vector<4x256xf32>
    %cst_6 = arith.constant dense<0.000000e+00> : vector<256xf32>
    %19 = vector.multi_reduction <add>, %18, %cst_6 [0] : vector<4x256xf32> to vector<256xf32>
    %20 = vector.shape_cast %19 : vector<256xf32> to vector<1x256xf32>
    %21 = tpu.reciprocal %20 {approx = true} : vector<1x256xf32> -> vector<1x256xf32>
    %22 = vector.broadcast %21 : vector<1x256xf32> to vector<4x256xf32>
    %23 = arith.mulf %18, %22 : vector<4x256xf32>
    %24 = tpu.iota {dimensions = array<i32: 0>} : vector<4x256xi32>
    %25 = vector.broadcast %7 : vector<1x256xi32> to vector<4x256xi32>
    %26 = arith.cmpi eq, %24, %25 : vector<4x256xi32>
    %27 = arith.extui %26 : vector<4x256xi1> to vector<4x256xi32>
    %28 = arith.sitofp %27 : vector<4x256xi32> to vector<4x256xf32>
    %29 = arith.mulf %1, %28 : vector<4x256xf32>
    %cst_7 = arith.constant dense<0.000000e+00> : vector<256xf32>
    %30 = vector.multi_reduction <add>, %29, %cst_7 [0] : vector<4x256xf32> to vector<256xf32>
    %31 = vector.shape_cast %30 : vector<256xf32> to vector<1x256xf32>
    %32 = math.log %14 : vector<1x256xf32>
    %33 = arith.addf %32, %9 : vector<1x256xf32>
    %34 = arith.subf %33, %31 : vector<1x256xf32>
    %cst_8 = arith.constant 0.000000e+00 : f32
    %35 = vector.broadcast %cst_8 : f32 to vector<1x256xf32>
    %36 = arith.select %5, %34, %35 : vector<1x256xi1>, vector<1x256xf32>
    %c0_9 = arith.constant 0 : index
    %c0_10 = arith.constant 0 : index
    %37 = vector.load %arg4[%c0_9, %c0_10] : memref<1x256xf32, #tpu.memory_space<vmem>>, vector<1x256xf32>
    tpu.vector_store %arg4[%c0_9, %c0_10], %36 {strides = array<i32>} : memref<1x256xf32, #tpu.memory_space<vmem>>, vector<1x256xf32>,
    %38 = arith.subf %28, %23 : vector<4x256xf32>
    %39 = math.absf %38 : vector<4x256xf32>
    %cst_11 = arith.constant -1.000000e+00 : f32
    %40 = vector.shape_cast %5 : vector<1x256xi1> to vector<1x256xi1>
    %41 = vector.broadcast %40 : vector<1x256xi1> to vector<4x256xi1>
    %42 = vector.broadcast %cst_11 : f32 to vector<4x256xf32>
    %43 = arith.select %41, %39, %42 : vector<4x256xi1>, vector<4x256xf32>
    %44 = arith.truncf %43 : vector<4x256xf32> to vector<4x256xbf16>
    %c0_12 = arith.constant 0 : index
    %c0_13 = arith.constant 0 : index
    %45 = vector.load %arg5[%c0_12, %c0_13] : memref<4x256xbf16, #tpu.memory_space<vmem>>, vector<4x256xbf16>
    tpu.vector_store %arg5[%c0_12, %c0_13], %44 {strides = array<i32>} : memref<4x256xbf16, #tpu.memory_space<vmem>>, vector<4x256xbf16>,
    return
  }
  func.func @transform_0(%arg0: i32, %arg1: i32) -> (i32, i32, i32) {
    %c0_i32 = arith.constant 0 : i32
    %c0_i32_0 = arith.constant 0 : i32
    return %arg0, %c0_i32, %arg1 : i32, i32, i32
  }
  func.func @transform_1(%arg0: i32, %arg1: i32) -> (i32, i32, i32) {
    %c0_i32 = arith.constant 0 : i32
    %c0_i32_0 = arith.constant 0 : i32
    return %arg0, %c0_i32, %arg1 : i32, i32, i32
  }
  func.func @transform_2(%arg0: i32, %arg1: i32) -> (i32, i32) {
    %c1_i32 = arith.constant 1 : i32
    %0 = arith.muli %arg0, %c1_i32 : i32
    %1 = arith.addi %0, %arg1 : i32
    %c0_i32 = arith.constant 0 : i32
    %c0_i32_0 = arith.constant 0 : i32
    return %c0_i32, %1 : i32, i32
  }
  func.func @transform_3(%arg0: i32, %arg1: i32) -> (i32, i32) {
    %c1_i32 = arith.constant 1 : i32
    %0 = arith.muli %arg0, %c1_i32 : i32
    %1 = arith.addi %0, %arg1 : i32
    %c0_i32 = arith.constant 0 : i32
    %c0_i32_0 = arith.constant 0 : i32
    return %c0_i32, %1 : i32, i32
  }
}

</mosaic_0001>

<llo_original>
// kernel: neg.6
$region0: #{neg.6}
  #allocation0 [shape = 's32[1]{0}', space=sflag, size = 0x4, scoped, tag = 'scoped memory for neg.6']
  %s0 = inlined_call_operand.vmem [shape: bf16[4,512], index: 0, kind: input, shape index: {}]
  %s1 = inlined_call_operand.vmem [shape: bf16[4,512], index: 1, kind: output, shape index: {}]
  %s3 = sor.u32 15, 7
  %s4 = sand.u32 %s3, 5
  %s5 = sshrl.u32 %s4, 1
  %s6 = sor.u32 %s4, %s5
  %s7 = sand.u32 3, %s6
  %v8 = vld [vmem:[%s0] sm:%s7]
  %v9 = vunpack.c.l.bf16 %v8
  %v10 = vunpack.c.h.bf16 %v8
  %11 = xla_tuple %v9
  %12 = xla_tuple %11
  %v13 = vxor.u32 %v9, 2147483648
  %14 = xla_tuple %v13
  %v15 = vpack.c.bf16 0.0, %v13
  %16 = vst [vmem:[%s1] sm:$0x3] %v15
  %s17 = scalar_lea.vmem %s0, 2
  %s19 = sor.u32 15, 7
  %s20 = sand.u32 %s19, 5
  %s21 = sshrl.u32 %s20, 1
  %s22 = sor.u32 %s20, %s21
  %s23 = sand.u32 3, %s22
  %v24 = vld [vmem:[%s17] sm:%s23]
  %v25 = vunpack.c.l.bf16 %v24
  %v26 = vunpack.c.h.bf16 %v24
  %27 = xla_tuple %v25
  %28 = xla_tuple %27
  %v29 = vxor.u32 %v25, 2147483648
  %30 = xla_tuple %v29
  %s31 = scalar_lea.vmem %s1, 2
  %v32 = vpack.c.bf16 0.0, %v29
  %33 = vst [vmem:[%s31] sm:$0x3] %v32
  %s34 = scalar_lea.vmem %s0, 4
  %s36 = sor.u32 15, 7
  %s37 = sand.u32 %s36, 5
  %s38 = sshrl.u32 %s37, 1
  %s39 = sor.u32 %s37, %s38
  %s40 = sand.u32 3, %s39
  %v41 = vld [vmem:[%s34] sm:%s40]
  %v42 = vunpack.c.l.bf16 %v41
  %v43 = vunpack.c.h.bf16 %v41
  %44 = xla_tuple %v42
  %45 = xla_tuple %44
  %v46 = vxor.u32 %v42, 2147483648
  %47 = xla_tuple %v46
  %s48 = scalar_lea.vmem %s1, 4
  %v49 = vpack.c.bf16 0.0, %v46
  %50 = vst [vmem:[%s48] sm:$0x3] %v49
  %s51 = scalar_lea.vmem %s0, 6
  %s53 = sor.u32 15, 7
  %s54 = sand.u32 %s53, 5
  %s55 = sshrl.u32 %s54, 1
  %s56 = sor.u32 %s54, %s55
  %s57 = sand.u32 3, %s56
  %v58 = vld [vmem:[%s51] sm:%s57]
  %v59 = vunpack.c.l.bf16 %v58
  %v60 = vunpack.c.h.bf16 %v58
  %61 = xla_tuple %v59
  %62 = xla_tuple %61
  %v63 = vxor.u32 %v59, 2147483648
  %64 = xla_tuple %v63
  %s65 = scalar_lea.vmem %s1, 6
  %v66 = vpack.c.bf16 0.0, %v63
  %67 = vst [vmem:[%s65] sm:$0x3] %v66

// kernel: neg.9
$region0: #{neg.9}
  #allocation0 [shape = 's32[1]{0}', space=sflag, size = 0x4, scoped, tag = 'scoped memory for neg.9']
  %s0 = inlined_call_operand.vmem [shape: f32[512], index: 0, kind: input, shape index: {}]
  %s1 = inlined_call_operand.vmem [shape: f32[512], index: 1, kind: output, shape index: {}]
  %v2 = vld [vmem:[%s0] sm:$0xf]
  %3 = xla_tuple %v2
  %4 = xla_tuple %3
  %v5 = vxor.u32 %v2, 2147483648
  %6 = xla_tuple %v5
  %7 = vst [vmem:[%s1] sm:$0xf] %v5

// kernel: ohem_cross_entropy_2d.1
$region0: #{ohem_cross_entropy_2d.1}
  #allocation0 [shape = 'u32[]', space=smem, size = 0x4, offset = 0x4, fixed_abs, tag = 'smem constant byte address 0x4 - core index']
  #allocation1 [shape = 'u32[72,128]{1,0:T(1,128)}', space=vmem, size = 0x9000, scoped, tag = 'internal scratch']
  %s0 = inlined_call_operand.vmem [shape: f32[2,4,256], index: 0, kind: input, shape index: {}]
  %s1 = inlined_call_operand.vmem [shape: s32[2,1,256], index: 1, kind: input, shape index: {}]
  %s2 = inlined_call_operand.vmem [shape: f32[1,512], index: 2, kind: output, shape index: {0}]
  %s3 = inlined_call_operand.vmem [shape: bf16[4,512], index: 3, kind: output, shape index: {1}]
  %4 = xla_tuple %s2, %s3
  %s5 = sld [smem:[#allocation0]]
  $region49: #{ohem_cross_entropy_2d.1} parent=0
    _
  %s7 = ssub.s32 1, %s5
  %s8 = scalar_select 0, %s7, %s5
  loop: start=0, step=1, limit=4
  $region2: #{ohem_cross_entropy_2d.1} parent=0 // loop_pre_header
    _
  $region3: #{ohem_cross_entropy_2d.1} parent=0 // loop_header
    %s10 = sphi 0, %s14
    %p11 = scmp.ge.s32.totalorder %s10, 4
    %s17 = sphi 0, %s29
    %s18 = sphi 0, %s25
    %s19 = sphi 0, %s17
    %s20 = sphi 0, %s18
    %s21 = sphi 0, %s19
    %s22 = sphi 0, %s20
    %s34 = sphi 0, %s36
    %s37 = sphi 0, %s34
    %s38 = sphi 0, %s37
    %s54 = sphi 0, %s38
    %s62 = sphi 0, %s64
    %s65 = sphi 0, %s62
    %s66 = sphi 0, %s65
    %s82 = sphi 0, %s66
    %s90 = sphi 0, %s92
    %s93 = sphi 0, %s90
    %s94 = sphi 0, %s93
    %s110 = sphi 0, %s94
    %s118 = sphi 0, %s120
    %s121 = sphi 0, %s118
    %s122 = sphi 0, %s121
    %s138 = sphi 0, %s122
  $region4: #{ohem_cross_entropy_2d.1} parent=0 // loop_header_branch
    %13 = sbr.rel (%p11) target = $region8
  $region5: #{ohem_cross_entropy_2d.1} parent=0 // loop_body
    %s15 = ssub.s32 %s10, 1
    %s16 = ssub.s32 %s10, 2
    %s23 = sadd.s32 1, %s18
    %p24 = scmp.ge.s32.totalorder %s23, 1
    %s25 = scalar_select %p24, 0, %s23
    %s26 = sadd.s32 1, %s17
    %s27 = scalar_select %p24, %s26, %s17
    %p28 = scmp.ge.s32.totalorder %s27, 2
    %s29 = scalar_select %p28, 0, %s27
    %s30 = ssub.s32 %s17, %s29
    %s31 = ssub.s32 %s18, %s25
    %s32 = sor.u32 %s30, %s31
    %p33 = scmp.eq.s32.totalorder %s32, 0
    %s35 = sadd.s32 %s34, 1
    %s36 = scalar_select %p33, %s34, %s35
    %p39 = pneg %p33
    %p40 = scmp.eq.s32.totalorder %s10, 1
    %p41 = por %p39, %p40
    %p42 = scmp.ne.s32.totalorder %s34, %s37
    %p43 = scmp.eq.s32.totalorder %s10, 0
    %p44 = por %p42, %p43
    %p45 = scmp.ne.s32.totalorder %s34, %s37
    %p46 = scmp.eq.s32.totalorder %s15, 1
    %p47 = por %p45, %p46
    %p48 = scmp.ne.s32.totalorder %s37, %s38
    %p49 = scmp.eq.s32.totalorder %s15, 0
    %p50 = por %p48, %p49
    %p51 = scmp.ne.s32.totalorder %s37, %s38
    %p52 = scmp.eq.s32.totalorder %s16, 1
    %p53 = por %p51, %p52
    %p55 = scmp.ne.s32.totalorder %s38, %s54
    %p56 = scmp.eq.s32.totalorder %s16, 0
    %p57 = por %p55, %p56
    %s58 = ssub.s32 %s17, %s29
    %s59 = ssub.s32 %s18, %s25
    %s60 = sor.u32 %s58, %s59
    %p61 = scmp.eq.s32.totalorder %s60, 0
    %s63 = sadd.s32 %s62, 1
    %s64 = scalar_select %p61, %s62, %s63
    %p67 = pneg %p61
    %p68 = scmp.eq.s32.totalorder %s10, 1
    %p69 = por %p67, %p68
    %p70 = scmp.ne.s32.totalorder %s62, %s65
    %p71 = scmp.eq.s32.totalorder %s10, 0
    %p72 = por %p70, %p71
    %p73 = scmp.ne.s32.totalorder %s62, %s65
    %p74 = scmp.eq.s32.totalorder %s15, 1
    %p75 = por %p73, %p74
    %p76 = scmp.ne.s32.totalorder %s65, %s66
    %p77 = scmp.eq.s32.totalorder %s15, 0
    %p78 = por %p76, %p77
    %p79 = scmp.ne.s32.totalorder %s65, %s66
    %p80 = scmp.eq.s32.totalorder %s16, 1
    %p81 = por %p79, %p80
    %p83 = scmp.ne.s32.totalorder %s66, %s82
    %p84 = scmp.eq.s32.totalorder %s16, 0
    %p85 = por %p83, %p84
    %s86 = sadd.s32 %s17, %s18
    %s87 = sadd.s32 %s29, %s25
    %s88 = ssub.s32 %s86, %s87
    %p89 = scmp.eq.s32.totalorder %s88, 0
    %s91 = sadd.s32 %s90, 1
    %s92 = scalar_select %p89, %s90, %s91
    %p95 = pneg %p89
    %p96 = scmp.eq.s32.totalorder %s10, 1
    %p97 = por %p95, %p96
    %p98 = scmp.ne.s32.totalorder %s90, %s93
    %p99 = scmp.eq.s32.totalorder %s10, 0
    %p100 = por %p98, %p99
    %p101 = scmp.ne.s32.totalorder %s90, %s93
    %p102 = scmp.eq.s32.totalorder %s15, 1
    %p103 = por %p101, %p102
    %p104 = scmp.ne.s32.totalorder %s93, %s94
    %p105 = scmp.eq.s32.totalorder %s15, 0
    %p106 = por %p104, %p105
    %p107 = scmp.ne.s32.totalorder %s93, %s94
    %p108 = scmp.eq.s32.totalorder %s16, 1
    %p109 = por %p107, %p108
    %p111 = scmp.ne.s32.totalorder %s94, %s110
    %p112 = scmp.eq.s32.totalorder %s16, 0
    %p113 = por %p111, %p112
    %s114 = sadd.s32 %s17, %s18
    %s115 = sadd.s32 %s29, %s25
    %s116 = ssub.s32 %s114, %s115
    %p117 = scmp.eq.s32.totalorder %s116, 0
    %s119 = sadd.s32 %s118, 1
    %s120 = scalar_select %p117, %s118, %s119
    %p123 = pneg %p117
    %p124 = scmp.eq.s32.totalorder %s10, 1
    %p125 = por %p123, %p124
    %p126 = scmp.ne.s32.totalorder %s118, %s121
    %p127 = scmp.eq.s32.totalorder %s10, 0
    %p128 = por %p126, %p127
    %p129 = scmp.ne.s32.totalorder %s118, %s121
    %p130 = scmp.eq.s32.totalorder %s15, 1
    %p131 = por %p129, %p130
    %p132 = scmp.ne.s32.totalorder %s121, %s122
    %p133 = scmp.eq.s32.totalorder %s15, 0
    %p134 = por %p132, %p133
    %p135 = scmp.ne.s32.totalorder %s121, %s122
    %p136 = scmp.eq.s32.totalorder %s16, 1
    %p137 = por %p135, %p136
    %p139 = scmp.ne.s32.totalorder %s122, %s138
    %p140 = scmp.eq.s32.totalorder %s16, 0
    %p141 = por %p139, %p140
    %p142 = scmp.le.s32.totalorder 1, %s10
    %p143 = scmp.lt.s32.totalorder %s10, 3
    %p144 = pnand %p142, %p143
    %p145 = pneg %p144
    // Predicated region
    $region9: #{ohem_cross_entropy_2d.1} parent=5 // pred_check
      _
    $region10: #{ohem_cross_entropy_2d.1} parent=5 // pred_check_branch
      %147 = sbr.rel (%p144) target = $region12
    $region11: #{ohem_cross_entropy_2d.1} parent=5 // pred_region
      %s148 = ssub.s32 %s10, 1
    $region12: #{ohem_cross_entropy_2d.1} parent=5 // pred_fallthru
      _
    %p149 = scmp.lt.s32.totalorder %s10, 2
    // Predicated region
    $region13: #{ohem_cross_entropy_2d.1} parent=5 // pred_check
      %p150 = pneg %p149
    $region14: #{ohem_cross_entropy_2d.1} parent=5 // pred_check_branch
      %152 = sbr.rel (%p150) target = $region16
    $region15: #{ohem_cross_entropy_2d.1} parent=5 // pred_region
      // Predicated region
      $region17: #{ohem_cross_entropy_2d.1} parent=15 // pred_check
        %p153 = pneg %p44
      $region18: #{ohem_cross_entropy_2d.1} parent=15 // pred_check_branch
        %155 = sbr.rel (%p153) target = $region20
      $region19: #{ohem_cross_entropy_2d.1} parent=15 // pred_region
        %s156 = smul.u32 2, %s18
        %p157 = scmp.lt.s32.totalorder %s17, 1
        %s158 = scalar_select %p157, %s17, 1
        %p159 = scmp.lt.s32.totalorder %s156, 1
        %s160 = scalar_select %p159, %s156, 1
        %s161 = smul.addr %s158, 2
        %s162 = sadd.s32 %s160, %s161
        %s163 = smul.addr %s162, 4
        %s164 = scalar_lea.vmem %s0, %s163
        %s165 = smul.u32 2, %s18
      $region20: #{ohem_cross_entropy_2d.1} parent=15 // pred_fallthru
        _
      // Predicated region
      $region21: #{ohem_cross_entropy_2d.1} parent=15 // pred_check
        %p166 = pneg %p72
      $region22: #{ohem_cross_entropy_2d.1} parent=15 // pred_check_branch
        %168 = sbr.rel (%p166) target = $region24
      $region23: #{ohem_cross_entropy_2d.1} parent=15 // pred_region
        %s169 = smul.u32 2, %s18
        %p170 = scmp.lt.s32.totalorder %s17, 1
        %s171 = scalar_select %p170, %s17, 1
        %p172 = scmp.lt.s32.totalorder %s169, 1
        %s173 = scalar_select %p172, %s169, 1
        %s174 = smul.addr %s171, 2
        %s175 = sadd.s32 %s173, %s174
        %s176 = scalar_lea.vmem %s1, %s175
        %s177 = smul.u32 2, %s18
      $region24: #{ohem_cross_entropy_2d.1} parent=15 // pred_fallthru
        _
    $region16: #{ohem_cross_entropy_2d.1} parent=5 // pred_fallthru
      _
    %p178 = scmp.le.s32.totalorder 1, %s10
    %p179 = scmp.lt.s32.totalorder %s10, 3
    %p180 = pnand %p178, %p179
    %p181 = pneg %p180
    // Predicated region
    $region25: #{ohem_cross_entropy_2d.1} parent=5 // pred_check
      _
    $region26: #{ohem_cross_entropy_2d.1} parent=5 // pred_check_branch
      %183 = sbr.rel (%p180) target = $region28
    $region27: #{ohem_cross_entropy_2d.1} parent=5 // pred_region
      %s184 = ssub.s32 %s10, 1
      %s185 = smul.u32 2, %s20
      %p186 = scmp.lt.s32.totalorder %s19, 1
      %s187 = scalar_select %p186, %s19, 1
      %p188 = scmp.lt.s32.totalorder %s185, 1
      %s189 = scalar_select %p188, %s185, 1
      %s190 = smul.addr %s187, 2
      %s191 = sadd.s32 %s189, %s190
      %s192 = smul.addr %s191, 4
      %s193 = scalar_lea.vmem %s0, %s192
      %p194 = pneg %p50
      %p195 = pneg %p47
      %s196 = smul.u32 2, %s20
      %p197 = scmp.lt.s32.totalorder %s19, 1
      %s198 = scalar_select %p197, %s19, 1
      %p199 = scmp.lt.s32.totalorder %s196, 1
      %s200 = scalar_select %p199, %s196, 1
      %s201 = smul.addr %s198, 2
      %s202 = sadd.s32 %s200, %s201
      %s203 = scalar_lea.vmem %s1, %s202
      %p204 = pneg %p78
      %p205 = pneg %p75
      %p206 = pneg %p106
      %p207 = pneg %p103
      %s208 = sadd.s32 %s19, %s20
      %s209 = smul.u32 2, %s208
      %p210 = scmp.lt.s32.totalorder %s209, 3
      %s211 = scalar_select %p210, %s209, 3
      %s212 = scalar_lea.vmem %s2, %s211
      %p213 = pneg %p134
      %p214 = pneg %p131
      %s215 = sadd.s32 %s19, %s20
      %s216 = smul.u32 2, %s215
      %p217 = scmp.lt.s32.totalorder %s216, 3
      %s218 = scalar_select %p217, %s216, 3
      %s219 = smul.addr %s218, 2
      %s220 = scalar_lea.vmem %s3, %s219
      %s221 = smul.u32 2, %s20
      %p222 = scmp.lt.s32.totalorder %s19, 1
      %s223 = scalar_select %p222, %s19, 1
      %p224 = scmp.lt.s32.totalorder %s221, 1
      %s225 = scalar_select %p224, %s221, 1
      %s226 = smul.addr %s223, 2
      %s227 = sadd.s32 %s225, %s226
      %s228 = smul.addr %s227, 4
      %s229 = scalar_lea.vmem %s0, %s228
      %s230 = smul.u32 2, %s20
      %s231 = smul.u32 2, %s20
      %p232 = scmp.lt.s32.totalorder %s19, 1
      %s233 = scalar_select %p232, %s19, 1
      %p234 = scmp.lt.s32.totalorder %s231, 1
      %s235 = scalar_select %p234, %s231, 1
      %s236 = smul.addr %s233, 2
      %s237 = sadd.s32 %s235, %s236
      %s238 = scalar_lea.vmem %s1, %s237
      %s239 = smul.u32 2, %s20
      %s240 = sadd.s32 %s19, %s20
      %s241 = smul.u32 2, %s240
      %p242 = scmp.lt.s32.totalorder %s241, 3
      %s243 = scalar_select %p242, %s241, 3
      %s244 = scalar_lea.vmem %s2, %s243
      %s245 = sadd.s32 %s19, %s20
      %s246 = smul.u32 2, %s245
      %s247 = sadd.s32 %s19, %s20
      %s248 = smul.u32 2, %s247
      %p249 = scmp.lt.s32.totalorder %s248, 3
      %s250 = scalar_select %p249, %s248, 3
      %s251 = smul.addr %s250, 2
      %s252 = scalar_lea.vmem %s3, %s251
      %s253 = sadd.s32 %s19, %s20
      %s254 = smul.u32 2, %s253
      %v255 = vld [vmem:[%s229] sm:$0xff]
      %v256 = vld [vmem:[%s238] sm:$0x3]
      %vm257 = vcmp.ne.s32.totalorder %v256, 255
      %v258 = vsel %vm257, %v256, 0
      %260 = vst [vmem:[#allocation1] ss:$2 sm:$0xff] %v255
      %v261 = vld.sshfl [vmem:[#allocation1] sm:$0xff pattern:$0x75316420]
      %v262 = vld.sshfl [vmem:[#allocation1 + $0x8] sm:$0xff pattern:$0x75316420]
      %vm265 = vcmask 1043456
      %v266 = vsel %vm265, %v261, -inf
      %v267 = vrot.slane %v266, 4
      %v268 = vmax.f32 %v266, %v267
      %v269 = vrot.slane %v268, 2
      %v270 = vmax.f32 %v268, %v269
      %v271 = vrot.slane %v270, 1
      %v272 = vmax.f32 %v270, %v271
      %v273 = vsel %vm265, %v262, -inf
      %v274 = vrot.slane %v273, 4
      %v275 = vmax.f32 %v273, %v274
      %v276 = vrot.slane %v275, 2
      %v277 = vmax.f32 %v275, %v276
      %v278 = vrot.slane %v277, 1
      %v279 = vmax.f32 %v277, %v278
      %v282 = vrot.slane %v279, 4
      %v283 = vsel %vm265, %v272, %v282
      %v285 = vsub.f32 %v255, %v283
      %v286 = vmul.f32 %v285, 1.442695
      %v287 = vpow.pop %v286
      %289 = vst [vmem:[#allocation1] ss:$2 sm:$0xff] %v287
      %v290 = vld.sshfl [vmem:[#allocation1] sm:$0xff pattern:$0x75316420]
      %v291 = vld.sshfl [vmem:[#allocation1 + $0x8] sm:$0xff pattern:$0x75316420]
      %v294 = vsel %vm265, %v290, 0.0
      %v295 = vrot.slane %v294, 4
      %v296 = vadd.f32 %v294, %v295
      %v297 = vrot.slane %v296, 2
      %v298 = vadd.f32 %v296, %v297
      %v299 = vrot.slane %v298, 1
      %v300 = vadd.f32 %v298, %v299
      %v301 = vsel %vm265, %v291, 0.0
      %v302 = vrot.slane %v301, 4
      %v303 = vadd.f32 %v301, %v302
      %v304 = vrot.slane %v303, 2
      %v305 = vadd.f32 %v303, %v304
      %v306 = vrot.slane %v305, 1
      %v307 = vadd.f32 %v305, %v306
      %v308 = vrcp.pop %v300
      %v309 = vrcp.pop %v307
      %v312 = vrot.slane %v309, 4
      %v313 = vsel %vm265, %v308, %v312
      %v315 = vmul.f32 %v287, %v313
      %v316 = vmul.f32 %v315, 1.442695
      %v317 = vpow.pop %v316
      %319 = vst [vmem:[#allocation1] ss:$2 sm:$0xff] %v317
      %v320 = vld.sshfl [vmem:[#allocation1] sm:$0xff pattern:$0x75316420]
      %v321 = vld.sshfl [vmem:[#allocation1 + $0x8] sm:$0xff pattern:$0x75316420]
      %v324 = vsel %vm265, %v320, 0.0
      %v325 = vrot.slane %v324, 4
      %v326 = vadd.f32 %v324, %v325
      %v327 = vrot.slane %v326, 2
      %v328 = vadd.f32 %v326, %v327
      %v329 = vrot.slane %v328, 1
      %v330 = vadd.f32 %v328, %v329
      %v331 = vsel %vm265, %v321, 0.0
      %v332 = vrot.slane %v331, 4
      %v333 = vadd.f32 %v331, %v332
      %v334 = vrot.slane %v333, 2
      %v335 = vadd.f32 %v333, %v334
      %v336 = vrot.slane %v335, 1
      %v337 = vadd.f32 %v335, %v336
      %v338 = vrcp.pop %v330
      %v339 = vrcp.pop %v337
      %v342 = vrot.slane %v339, 4
      %v343 = vsel %vm265, %v338, %v342
      %v345 = vmul.f32 %v317, %v343
      %v346 = vlaneseq
      %v347 = vshrl.u32 %v346, 7
      %v348 = vperm.slane %v258, 0
      %v349 = vperm.slane %v258, 1
      %vm350 = vcmp.eq.s32.totalorder %v347, %v348
      %vm351 = vcmp.eq.s32.totalorder %v347, %v349
      %v352 = vsel %vm350, 1, 0
      %v353 = vsel %vm351, 1, 0
      %v354 = vcvt.s32.f32 %v352
      %v355 = vcvt.s32.f32 %v353
      %v358 = vrot.slane %v355, 4
      %v359 = vsel %vm265, %v354, %v358
      %v361 = vmul.f32 %v255, %v359
      %363 = vst [vmem:[#allocation1] ss:$2 sm:$0xff] %v361
      %v364 = vld.sshfl [vmem:[#allocation1] sm:$0xff pattern:$0x75316420]
      %v365 = vld.sshfl [vmem:[#allocation1 + $0x8] sm:$0xff pattern:$0x75316420]
      %v368 = vsel %vm265, %v364, 0.0
      %v369 = vrot.slane %v368, 4
      %v370 = vadd.f32 %v368, %v369
      %v371 = vrot.slane %v370, 2
      %v372 = vadd.f32 %v370, %v371
      %v373 = vrot.slane %v372, 1
      %v374 = vadd.f32 %v372, %v373
      %v375 = vsel %vm265, %v365, 0.0
      %v376 = vrot.slane %v375, 4
      %v377 = vadd.f32 %v375, %v376
      %v378 = vrot.slane %v377, 2
      %v379 = vadd.f32 %v377, %v378
      %v380 = vrot.slane %v379, 1
      %v381 = vadd.f32 %v379, %v380
      %v382 = vlog2.pop %v300
      %v383 = vmul.f32 %v382, 0.6931472
      %v384 = vlog2.pop %v307
      %v385 = vmul.f32 %v384, 0.6931472
      %v386 = vadd.f32 %v383, %v272
      %v387 = vadd.f32 %v385, %v279
      %v388 = vsub.f32 %v386, %v374
      %v389 = vsub.f32 %v387, %v381
      %v392 = vrot.slane %v389, 7
      %vm393 = vcmask 1040384
      %v394 = vsel %vm393, %v388, %v392
      %v396 = vsel %vm257, %v394, 0.0
      %v397 = vlaneseq
      %vm398 = vcmp.ge.s32.totalorder %v397, 0
      %vm399 = vcmp.lt.s32.totalorder %v397, 256
      %vm400 = vmand %vm398, %vm399
      %401 = vst.msk [vmem:[%s244] sm:$0x3] %vm400, %v396
      %403 = vst [vmem:[#allocation1] ss:$2 sm:$0xff] %v345
      %v404 = vld.sshfl [vmem:[#allocation1] sm:$0xff pattern:$0x75316420]
      %v405 = vld.sshfl [vmem:[#allocation1 + $0x8] sm:$0xff pattern:$0x75316420]
      %v408 = vsub.f32 %v354, %v404
      %v409 = vsub.f32 %v355, %v405
      %v410 = vand.u32 2147483647, %v408
      %v411 = vand.u32 2147483647, %v409
      %v412 = vsel %vm257, 1, 0
      %v413 = vperm.slane %v412, 0
      %v414 = vperm.slane %v412, 1
      %vm415 = vcmp.eq.s32.totalorder %v413, 1
      %vm416 = vcmp.eq.s32.totalorder %v414, 1
      %v417 = vsel %vm415, %v410, -1.0
      %v418 = vsel %vm416, %v411, -1.0
      %v419 = vpack.c.bf16 %v418, %v417
      %v421 = vrot.slane %v419, 2
      %vm422 = vcmask 1041408
      %v425 = vsel %vm422, %v419, %v421
      %427 = vst [vmem:[%s252] sm:$0xf] %v425
      %s428 = sadd.s32 %s19, %s20
      %s429 = smul.u32 2, %s428
      %p430 = scmp.lt.s32.totalorder %s429, 3
      %s431 = scalar_select %p430, %s429, 3
      %s432 = scalar_lea.vmem %s2, %s431
      %s433 = sadd.s32 %s19, %s20
      %s434 = smul.u32 2, %s433
      %p435 = scmp.lt.s32.totalorder %s434, 3
      %s436 = scalar_select %p435, %s434, 3
      %s437 = smul.addr %s436, 2
      %s438 = scalar_lea.vmem %s3, %s437
      // Predicated region
      $region29: #{ohem_cross_entropy_2d.1} parent=27 // pred_check
        %p439 = pneg %p103
      $region30: #{ohem_cross_entropy_2d.1} parent=27 // pred_check_branch
        %441 = sbr.rel (%p439) target = $region32
      $region31: #{ohem_cross_entropy_2d.1} parent=27 // pred_region
        %s442 = sadd.s32 %s19, %s20
        %s443 = smul.u32 2, %s442
      $region32: #{ohem_cross_entropy_2d.1} parent=27 // pred_fallthru
        _
      // Predicated region
      $region33: #{ohem_cross_entropy_2d.1} parent=27 // pred_check
        %p444 = pneg %p131
      $region34: #{ohem_cross_entropy_2d.1} parent=27 // pred_check_branch
        %446 = sbr.rel (%p444) target = $region36
      $region35: #{ohem_cross_entropy_2d.1} parent=27 // pred_region
        %s447 = sadd.s32 %s19, %s20
        %s448 = smul.u32 2, %s447
      $region36: #{ohem_cross_entropy_2d.1} parent=27 // pred_fallthru
        _
    $region28: #{ohem_cross_entropy_2d.1} parent=5 // pred_fallthru
      _
    %p449 = scmp.le.s32.totalorder 2, %s10
    // Predicated region
    $region37: #{ohem_cross_entropy_2d.1} parent=5 // pred_check
      %p450 = pneg %p449
    $region38: #{ohem_cross_entropy_2d.1} parent=5 // pred_check_branch
      %452 = sbr.rel (%p450) target = $region40
    $region39: #{ohem_cross_entropy_2d.1} parent=5 // pred_region
      %s453 = ssub.s32 %s10, 2
      // Predicated region
      $region41: #{ohem_cross_entropy_2d.1} parent=39 // pred_check
        %p454 = pneg %p109
      $region42: #{ohem_cross_entropy_2d.1} parent=39 // pred_check_branch
        %456 = sbr.rel (%p454) target = $region44
      $region43: #{ohem_cross_entropy_2d.1} parent=39 // pred_region
        %s457 = sadd.s32 %s21, %s22
        %s458 = smul.u32 2, %s457
        %p459 = scmp.lt.s32.totalorder %s458, 3
        %s460 = scalar_select %p459, %s458, 3
        %s461 = scalar_lea.vmem %s2, %s460
      $region44: #{ohem_cross_entropy_2d.1} parent=39 // pred_fallthru
        _
      // Predicated region
      $region45: #{ohem_cross_entropy_2d.1} parent=39 // pred_check
        %p462 = pneg %p137
      $region46: #{ohem_cross_entropy_2d.1} parent=39 // pred_check_branch
        %464 = sbr.rel (%p462) target = $region48
      $region47: #{ohem_cross_entropy_2d.1} parent=39 // pred_region
        %s465 = sadd.s32 %s21, %s22
        %s466 = smul.u32 2, %s465
        %p467 = scmp.lt.s32.totalorder %s466, 3
        %s468 = scalar_select %p467, %s466, 3
        %s469 = smul.addr %s468, 2
        %s470 = scalar_lea.vmem %s3, %s469
      $region48: #{ohem_cross_entropy_2d.1} parent=39 // pred_fallthru
        _
    $region40: #{ohem_cross_entropy_2d.1} parent=5 // pred_fallthru
      _
  $region6: #{ohem_cross_entropy_2d.1} parent=0 // loop_footer
    %s14 = sadd.s32 1, %s10
  $region7: #{ohem_cross_entropy_2d.1} parent=0 // loop_footer_branch
    %9 = sbr.rel target = $region3
  $region8: #{ohem_cross_entropy_2d.1} parent=0 // loop_exit
    _

</llo_original>
